<compile_context>
chip_gen: v5e
topology: v5e:2x2
jax: 0.10.0
libtpu: 0.0.40
codegen_flags: <defaults>
</compile_context>

<pallas_src>
import functools

import jax
import jax.numpy as jnp
from jax.experimental import pallas as pl
from jax.experimental.pallas import tpu as pltpu

EPS = 1e-6
LANE = 128
SUBLANE = 8
VREG_ELEMS = SUBLANE * LANE          # 1024 elements per (8, 128) f32 vreg
MAX_TILE_ROWS = 4096                 # (4096, 128) f32 = 2 MiB per input block
MIN_PALLAS_ELEMS = 1 << 20           # below this, fused XLA wins on overhead


def _charbonnier_kernel(x_ref, y_ref, out_ref, acc_ref, *,
                        steps, num_blocks, valid_rows_last, tile_rows):
    """Accumulate sum(sqrt((x-y)^2 + eps)) into an (8, 128) resident scratch."""
    c = pl.program_id(0)             # "parallel" chunk axis (v7x megacore)
    i = pl.program_id(1)             # "arbitrary" reduction axis
    blk = c * steps + i              # global block index

    @pl.when(i == 0)
    def _init():
        acc_ref[...] = jnp.zeros_like(acc_ref)

    def _accumulate(mask_rows):
        x = x_ref[...].astype(jnp.float32)
        y = y_ref[...].astype(jnp.float32)
        diff = x - y
        err = jnp.sqrt(diff * diff + jnp.float32(EPS))
        if mask_rows is not None:
            row = jax.lax.broadcasted_iota(jnp.int32, err.shape, 0)
            err = jnp.where(row < mask_rows, err, jnp.float32(0.0))
        # Tree-sum into the small resident accumulator (pure VPU adds; no
        # extra full-tile VMEM traffic).
        acc_ref[...] += err.reshape(-1, SUBLANE, LANE).sum(axis=0)

    full_grid = (pl.num_programs(0) * steps == num_blocks) if False else None
    # Static structure flags (trace-time):
    grid_exact = (steps * 2 == num_blocks) or (steps == num_blocks)  # no overshoot
    last_full = (valid_rows_last == tile_rows)

    if last_full and grid_exact:
        # Common path: every block fully valid, no gating at all.
        _accumulate(None)
    else:
        in_range = blk < num_blocks
        is_last_block = blk == num_blocks - 1

        if last_full:
            # Only the (possible) overshoot step must be skipped.
            @pl.when(in_range)
            def _acc_full():
                _accumulate(None)
        else:
            @pl.when(jnp.logical_and(in_range, jnp.logical_not(is_last_block)))
            def _acc_full():
                _accumulate(None)

            @pl.when(is_last_block)
            def _acc_masked():
                _accumulate(valid_rows_last)

    @pl.when(i == steps - 1)
    def _finalize():
        out_ref[0, :, :] = acc_ref[...]


@functools.partial(jax.jit, static_argnames=("min_pallas_elems", "max_tile_rows"))
def l1_charbonnier_loss(x, y, *, min_pallas_elems=MIN_PALLAS_ELEMS,
                        max_tile_rows=MAX_TILE_ROWS):
    assert x.shape == y.shape, "X and Y must have the same shape"
    assert max_tile_rows % SUBLANE == 0
    n = x.size
    eps = jnp.float32(EPS)

    xf = jnp.ravel(x)
    yf = jnp.ravel(y)

    def _xla_sum(a, b):
        d = a.astype(jnp.float32) - b.astype(jnp.float32)
        return jnp.sum(jnp.sqrt(d * d + eps))

    n_main = (n // VREG_ELEMS) * VREG_ELEMS   # vreg-aligned prefix
    if n < min_pallas_elems or n_main == 0:
        # Small-n fallback: a fused XLA elementwise+reduce beats kernel launch
        # + pipeline prologue/epilogue at these sizes.
        return _xla_sum(xf, yf) / n

    # ---- Pallas path over the aligned prefix (no host-side jnp.pad copy) ----
    rows = n_main // LANE                     # multiple of 8
    x2d = xf[:n_main].reshape(rows, LANE)     # copy-free when n % 1024 == 0
    y2d = yf[:n_main].reshape(rows, LANE)

    tile_rows = min(max_tile_rows, rows)      # multiple of 8
    num_blocks = pl.cdiv(rows, tile_rows)
    valid_rows_last = rows - (num_blocks - 1) * tile_rows   # multiple of 8

    # Always give v7x's two TensorCores a chunk each when there is >1 block.
    n_chunks = 2 if num_blocks >= 2 else 1
    steps = pl.cdiv(num_blocks, n_chunks)     # grid may overshoot by <= 1 block

    if n_chunks * steps == num_blocks:
        def in_map(c, i):
            return (c * steps + i, 0)
    else:
        def in_map(c, i):
            # Clamp so the single overshoot step (odd num_blocks) never DMAs
            # out of bounds; its accumulation is skipped inside the kernel.
            return (jnp.minimum(c * steps + i, num_blocks - 1), 0)

    kernel = functools.partial(
        _charbonnier_kernel,
        steps=steps,
        num_blocks=num_blocks,
        valid_rows_last=valid_rows_last,
        tile_rows=tile_rows,
    )

    partials = pl.pallas_call(
        kernel,
        out_shape=jax.ShapeDtypeStruct((n_chunks, SUBLANE, LANE), jnp.float32),
        grid_spec=pltpu.PrefetchScalarGridSpec(
            num_scalar_prefetch=0,
            grid=(n_chunks, steps),
            in_specs=[
                pl.BlockSpec((tile_rows, LANE), in_map),
                pl.BlockSpec((tile_rows, LANE), in_map),
            ],
            out_specs=pl.BlockSpec((1, SUBLANE, LANE), lambda c, i: (c, 0, 0)),
            scratch_shapes=[pltpu.VMEM((SUBLANE, LANE), jnp.float32)],
        ),
        compiler_params=pltpu.CompilerParams(
            dimension_semantics=("parallel", "arbitrary"),
        ),
    )(x2d, y2d)

    total = jnp.sum(partials)

    rem = n - n_main
    if rem:
        # <1024-element unaligned tail: tiny fused XLA reduce.
        total = total + _xla_sum(xf[n_main:], yf[n_main:])

    return total / n


def _reference(x, y):
    d = x.astype(jnp.float32) - y.astype(jnp.float32)
    return jnp.mean(jnp.sqrt(d * d + jnp.float32(EPS)))


if __name__ == "__main__":
    key = jax.random.PRNGKey(0)
    kx, ky = jax.random.split(key)

    # NCHW like the PyTorch usage (small image batch).
    shape = (2, 4, 16, 16)
    X = jax.random.normal(kx, shape, dtype=jnp.float32)
    Y = jax.random.normal(ky, shape, dtype=jnp.float32)
    ref = _reference(X, Y)

    # Force the Pallas kernel path (the default would route this tiny demo
    # input through the fused-XLA small-n fallback).
    loss = l1_charbonnier_loss(X, Y, min_pallas_elems=0)
    jax.block_until_ready(loss)
    assert jnp.allclose(loss, ref, rtol=1e-5, atol=1e-6), (loss, ref)

    # Default path (small-n XLA fallback) must agree too.
    loss_fb = l1_charbonnier_loss(X, Y)
    jax.block_until_ready(loss_fb)
    assert jnp.allclose(loss_fb, ref, rtol=1e-5, atol=1e-6), (loss_fb, ref)

    # Unaligned size; tiny max_tile_rows exercises the multi-block paths:
    #  - odd block count -> 2-chunk grid with a gated overshoot step
    #  - partial last block -> in-kernel row masking
    shape2 = (2, 4, 20, 20)   # 3200 elements: 3072 aligned + 128 tail
    X2 = jax.random.normal(kx, shape2, dtype=jnp.float32)
    Y2 = jax.random.normal(ky, shape2, dtype=jnp.float32)
    ref2 = _reference(X2, Y2)

    loss2a = l1_charbonnier_loss(X2, Y2, min_pallas_elems=0, max_tile_rows=8)
    jax.block_until_ready(loss2a)
    assert jnp.allclose(loss2a, ref2, rtol=1e-5, atol=1e-6), (loss2a, ref2)

    loss2b = l1_charbonnier_loss(X2, Y2, min_pallas_elems=0, max_tile_rows=16)
    jax.block_until_ready(loss2b)
    assert jnp.allclose(loss2b, ref2, rtol=1e-5, atol=1e-6), (loss2b, ref2)

    print("KERNEL_OK")
</pallas_src>

<mosaic_0001>
module attributes {stable_mosaic.version = 11 : i64} {
  func.func @_charbonnier_kernel(%arg0: i32, %arg1: i32, %arg2: memref<16x128xf32, #tpu.memory_space<vmem>>, %arg3: memref<16x128xf32, #tpu.memory_space<vmem>>, %arg4: memref<1x8x128xf32, #tpu.memory_space<vmem>>, %arg5: memref<8x128xf32, #tpu.memory_space<vmem>>) attributes {dimension_semantics = [#tpu.dimension_semantics<parallel>, #tpu.dimension_semantics<arbitrary>], iteration_bounds = array<i64: 1, 1>, scalar_prefetch = 0 : i64, scratch_operands = 1 : i64, tpu.core_type = #tpu.core_type<tc>, window_params = [{transform_indices = @transform_0, window_bounds = array<i64: 16, 128>}, {transform_indices = @transform_1, window_bounds = array<i64: 16, 128>}, {transform_indices = @transform_2, window_bounds = array<i64: 1, 8, 128>}]} {
    %c0_i32 = arith.constant 0 : i32
    %0 = arith.cmpi eq, %arg1, %c0_i32 : i32
    %1 = arith.extui %0 : i1 to i32
    %c0_i32_0 = arith.constant 0 : i32
    %2 = arith.cmpi ne, %1, %c0_i32_0 : i32
    scf.if %2 {
      %cst_11 = arith.constant 0.000000e+00 : f32
      %18 = vector.broadcast %cst_11 : f32 to vector<8x128xf32>
      %c0_12 = arith.constant 0 : index
      %c0_13 = arith.constant 0 : index
      %19 = vector.load %arg5[%c0_12, %c0_13] : memref<8x128xf32, #tpu.memory_space<vmem>>, vector<8x128xf32>
      tpu.vector_store %arg5[%c0_12, %c0_13], %18 {strides = array<i32>} : memref<8x128xf32, #tpu.memory_space<vmem>>, vector<8x128xf32>,
    } else {
    }
    %c0 = arith.constant 0 : index
    %c0_1 = arith.constant 0 : index
    %3 = vector.load %arg2[%c0, %c0_1] : memref<16x128xf32, #tpu.memory_space<vmem>>, vector<16x128xf32>
    %c0_2 = arith.constant 0 : index
    %c0_3 = arith.constant 0 : index
    %4 = vector.load %arg3[%c0_2, %c0_3] : memref<16x128xf32, #tpu.memory_space<vmem>>, vector<16x128xf32>
    %5 = arith.subf %3, %4 : vector<16x128xf32>
    %6 = arith.mulf %5, %5 : vector<16x128xf32>
    %cst = arith.constant 9.99999997E-7 : f32
    %7 = vector.broadcast %cst : f32 to vector<16x128xf32>
    %8 = arith.addf %6, %7 : vector<16x128xf32>
    %9 = math.sqrt %8 : vector<16x128xf32>
    %c0_4 = arith.constant 0 : index
    %c0_5 = arith.constant 0 : index
    %10 = vector.load %arg5[%c0_4, %c0_5] : memref<8x128xf32, #tpu.memory_space<vmem>>, vector<8x128xf32>
    %11 = vector.shape_cast %9 : vector<16x128xf32> to vector<2x8x128xf32>
    %cst_6 = arith.constant dense<0.000000e+00> : vector<8x128xf32>
    %12 = vector.multi_reduction <add>, %11, %cst_6 [0] : vector<2x8x128xf32> to vector<8x128xf32>
    %13 = arith.addf %10, %12 : vector<8x128xf32>
    %c0_7 = arith.constant 0 : index
    %c0_8 = arith.constant 0 : index
    %14 = vector.load %arg5[%c0_7, %c0_8] : memref<8x128xf32, #tpu.memory_space<vmem>>, vector<8x128xf32>
    tpu.vector_store %arg5[%c0_7, %c0_8], %13 {strides = array<i32>} : memref<8x128xf32, #tpu.memory_space<vmem>>, vector<8x128xf32>,
    %c0_i32_9 = arith.constant 0 : i32
    %15 = arith.cmpi eq, %arg1, %c0_i32_9 : i32
    %16 = arith.extui %15 : i1 to i32
    %c0_i32_10 = arith.constant 0 : i32
    %17 = arith.cmpi ne, %16, %c0_i32_10 : i32
    scf.if %17 {
      %c0_11 = arith.constant 0 : index
      %c0_12 = arith.constant 0 : index
      %18 = vector.load %arg5[%c0_11, %c0_12] : memref<8x128xf32, #tpu.memory_space<vmem>>, vector<8x128xf32>
      %c0_13 = arith.constant 0 : index
      %c0_14 = arith.constant 0 : index
      %c0_15 = arith.constant 0 : index
      %19 = vector.load %arg4[%c0_13, %c0_14, %c0_15] : memref<1x8x128xf32, #tpu.memory_space<vmem>>, vector<1x8x128xf32>
      %20 = vector.shape_cast %19 : vector<1x8x128xf32> to vector<8x128xf32>
      %21 = vector.shape_cast %18 : vector<8x128xf32> to vector<1x8x128xf32>
      tpu.vector_store %arg4[%c0_13, %c0_14, %c0_15], %21 {strides = array<i32>} : memref<1x8x128xf32, #tpu.memory_space<vmem>>, vector<1x8x128xf32>,
    } else {
    }
    return
  }
  func.func @transform_0(%arg0: i32, %arg1: i32) -> (i32, i32) {
    %c1_i32 = arith.constant 1 : i32
    %0 = arith.muli %arg0, %c1_i32 : i32
    %1 = arith.addi %0, %arg1 : i32
    %c0_i32 = arith.constant 0 : i32
    %c0_i32_0 = arith.constant 0 : i32
    return %1, %c0_i32 : i32, i32
  }
  func.func @transform_1(%arg0: i32, %arg1: i32) -> (i32, i32) {
    %c1_i32 = arith.constant 1 : i32
    %0 = arith.muli %arg0, %c1_i32 : i32
    %1 = arith.addi %0, %arg1 : i32
    %c0_i32 = arith.constant 0 : i32
    %c0_i32_0 = arith.constant 0 : i32
    return %1, %c0_i32 : i32, i32
  }
  func.func @transform_2(%arg0: i32, %arg1: i32) -> (i32, i32, i32) {
    %c0_i32 = arith.constant 0 : i32
    %c0_i32_0 = arith.constant 0 : i32
    %c0_i32_1 = arith.constant 0 : i32
    return %arg0, %c0_i32, %c0_i32_0 : i32, i32, i32
  }
}

</mosaic_0001>

<llo_original>
// kernel: l1_charbonnier_loss.1
$region0: #{l1_charbonnier_loss.1}
  #allocation0 [shape = 'u32[]', space=smem, size = 0x4, offset = 0x4, fixed_abs, tag = 'smem constant byte address 0x4 - core index']
  #allocation1 [shape = 'u32[72,128]{1,0:T(1,128)}', space=vmem, size = 0x9000, scoped, tag = 'internal scratch']
  #allocation2 [shape = 'f32[8,128]{1,0:T(8,128)}', space=vmem, size = 0x1000, scoped, tag = 'scratch operand']
  %s0 = inlined_call_operand.vmem [shape: f32[16,128], index: 0, kind: input, shape index: {}]
  %s1 = inlined_call_operand.vmem [shape: f32[16,128], index: 1, kind: input, shape index: {}]
  %s2 = inlined_call_operand.vmem [shape: f32[1,8,128], index: 2, kind: output, shape index: {}]
  %s3 = sld [smem:[#allocation0]]
  $region26: #{l1_charbonnier_loss.1} parent=0
    _
  %s5 = ssub.s32 1, %s3
  %s6 = scalar_select 0, %s5, %s3
  // Predicated region
  $region2: #{l1_charbonnier_loss.1} parent=0 // pred_check
    _
  $region3: #{l1_charbonnier_loss.1} parent=0 // pred_check_branch
    %8 = sbr.rel (0) target = $region5
  $region4: #{l1_charbonnier_loss.1} parent=0 // pred_region
    %s9 = sadd.s32 0, 0
    %s10 = smul.u32 2, %s9
    %p11 = scmp.lt.s32.totalorder %s10, 1
    %s12 = scalar_select %p11, %s10, 1
    %s13 = smul.addr %s12, 8
    %s14 = scalar_lea.vmem %s0, %s13
    %s15 = sadd.s32 0, 0
    %s16 = smul.u32 2, %s15
  $region5: #{l1_charbonnier_loss.1} parent=0 // pred_fallthru
    _
  // Predicated region
  $region6: #{l1_charbonnier_loss.1} parent=0 // pred_check
    _
  $region7: #{l1_charbonnier_loss.1} parent=0 // pred_check_branch
    %18 = sbr.rel (0) target = $region9
  $region8: #{l1_charbonnier_loss.1} parent=0 // pred_region
    %s19 = sadd.s32 0, 0
    %s20 = smul.u32 2, %s19
    %p21 = scmp.lt.s32.totalorder %s20, 1
    %s22 = scalar_select %p21, %s20, 1
    %s23 = smul.addr %s22, 8
    %s24 = scalar_lea.vmem %s1, %s23
    %s25 = sadd.s32 0, 0
    %s26 = smul.u32 2, %s25
  $region9: #{l1_charbonnier_loss.1} parent=0 // pred_fallthru
    _
  %s27 = sadd.s32 0, 0
  %s28 = smul.u32 2, %s27
  %p29 = scmp.lt.s32.totalorder %s28, 1
  %s30 = scalar_select %p29, %s28, 1
  %s31 = smul.addr %s30, 8
  %s32 = scalar_lea.vmem %s0, %s31
  %s33 = sadd.s32 0, 0
  %s34 = smul.u32 2, %s33
  %p35 = scmp.lt.s32.totalorder %s34, 1
  %s36 = scalar_select %p35, %s34, 1
  %s37 = smul.addr %s36, 8
  %s38 = scalar_lea.vmem %s1, %s37
  %s39 = sadd.s32 0, 0
  %s40 = smul.u32 2, %s39
  %p41 = scmp.lt.s32.totalorder %s40, 1
  %s42 = scalar_select %p41, %s40, 1
  %s43 = smul.addr %s42, 8
  %s44 = scalar_lea.vmem %s0, %s43
  %s45 = sadd.s32 0, 0
  %s46 = smul.u32 2, %s45
  %s47 = sadd.s32 0, 0
  %s48 = smul.u32 2, %s47
  %p49 = scmp.lt.s32.totalorder %s48, 1
  %s50 = scalar_select %p49, %s48, 1
  %s51 = smul.addr %s50, 8
  %s52 = scalar_lea.vmem %s1, %s51
  %s53 = sadd.s32 0, 0
  %s54 = smul.u32 2, %s53
  %p55 = scmp.eq.s32.totalorder 0, 0
  // Predicated region
  $region10: #{l1_charbonnier_loss.1} parent=0 // pred_check
    %p56 = pneg %p55
  $region11: #{l1_charbonnier_loss.1} parent=0 // pred_check_branch
    %58 = sbr.rel (%p56) target = $region13
  $region12: #{l1_charbonnier_loss.1} parent=0 // pred_region
    %59 = vst [vmem:[#allocation2] sm:$0xff] 0.0
  $region13: #{l1_charbonnier_loss.1} parent=0 // pred_fallthru
    _
  %v60 = vld [vmem:[%s44] sm:$0xff]
  %v61 = vld [vmem:[%s44 + $0x8] sm:$0xff]
  %v62 = vld [vmem:[%s52] sm:$0xff]
  %v63 = vld [vmem:[%s52 + $0x8] sm:$0xff]
  %v64 = vsub.f32 %v60, %v62
  %v65 = vsub.f32 %v61, %v63
  %v66 = vmul.f32 %v64, %v64
  %v67 = vmul.f32 %v65, %v65
  %v68 = vadd.f32 %v66, 1e-06
  %v69 = vadd.f32 %v67, 1e-06
  %v70 = vrsqrt.pop %v68
  %v71 = vmul.f32 %v70, %v68
  %v72 = vmul.f32 %v71, %v70
  %v73 = vmul.f32 0.5, %v72
  %v74 = vsub.f32 1.5, %v73
  %v75 = vmul.f32 %v70, %v74
  %v76 = vmul.f32 %v68, %v75
  %vm77 = vcmp.eq.f32.partialorder %v68, inf
  %v78 = vsel %vm77, %v68, %v76
  %vm79 = vcmp.eq.f32.partialorder %v68, 0.0
  %v80 = vand.u32 %v68, 2147483648
  %v81 = vsel %vm79, %v80, %v78
  %v82 = vrsqrt.pop %v69
  %v83 = vmul.f32 %v82, %v69
  %v84 = vmul.f32 %v83, %v82
  %v85 = vmul.f32 0.5, %v84
  %v86 = vsub.f32 1.5, %v85
  %v87 = vmul.f32 %v82, %v86
  %v88 = vmul.f32 %v69, %v87
  %vm89 = vcmp.eq.f32.partialorder %v69, inf
  %v90 = vsel %vm89, %v69, %v88
  %vm91 = vcmp.eq.f32.partialorder %v69, 0.0
  %v92 = vand.u32 %v69, 2147483648
  %v93 = vsel %vm91, %v92, %v90
  %v94 = vld [vmem:[#allocation2] sm:$0xff]
  %v95 = vadd.f32 %v81, %v93
  %v96 = vadd.f32 %v94, %v95
  %97 = vst [vmem:[#allocation2] sm:$0xff] %v96
  // Predicated region
  $region14: #{l1_charbonnier_loss.1} parent=0 // pred_check
    %p98 = pneg %p55
  $region15: #{l1_charbonnier_loss.1} parent=0 // pred_check_branch
    %100 = sbr.rel (%p98) target = $region17
  $region16: #{l1_charbonnier_loss.1} parent=0 // pred_region
    %v101 = vld [vmem:[#allocation2] sm:$0xff]
    %102 = vst [vmem:[%s2] sm:$0xff] %v101
  $region17: #{l1_charbonnier_loss.1} parent=0 // pred_fallthru
    _
  // Predicated region
  $region18: #{l1_charbonnier_loss.1} parent=0 // pred_check
    _
  $region19: #{l1_charbonnier_loss.1} parent=0 // pred_check_branch
    %104 = sbr.rel (0) target = $region21
  $region20: #{l1_charbonnier_loss.1} parent=0 // pred_region
    _
  $region21: #{l1_charbonnier_loss.1} parent=0 // pred_fallthru
    _
  // Predicated region
  $region22: #{l1_charbonnier_loss.1} parent=0 // pred_check
    _
  $region23: #{l1_charbonnier_loss.1} parent=0 // pred_check_branch
    %106 = sbr.rel (0) target = $region25
  $region24: #{l1_charbonnier_loss.1} parent=0 // pred_region
    _
  $region25: #{l1_charbonnier_loss.1} parent=0 // pred_fallthru
    _

</llo_original>
